<compile_context>
chip_gen: v7x
topology: tpu7x:2x2x1
jax: 0.10.0
libtpu: 0.0.40
codegen_flags: <defaults>
</compile_context>

<pallas_src>
import jax
import jax.numpy as jnp
from jax.experimental import pallas as pl
from jax.experimental.pallas import tpu as pltpu


def _snake_kernel(x_ref, alpha_ref, o_ref):
    # x_ref / o_ref : (r_tile, t_tile) tile
    # alpha_ref     : (r_tile, 1) per-row alpha
    x = x_ref[...].astype(jnp.float32)
    a = alpha_ref[...].astype(jnp.float32)

    # Tiny (r_tile, 1) tensors: reciprocal routed to the EUP slot (approx),
    # scale constants folded in once, broadcast happens in the single use.
    half_inv = 0.5 * pl.reciprocal(a + 1e-9, approx=True)
    two_a = 2.0 * a

    # sin(a*x)^2 == 0.5 * (1 - cos(2*a*x))  -> one fewer vmul per element.
    y = x + half_inv * (1.0 - jnp.cos(two_a * x))
    o_ref[...] = y.astype(o_ref.dtype)


def snake1d(x, alpha, *, target_elems_per_tile=512 * 1024):
    """Pallas implementation of Snake1d forward.

    x:     (B, C, T) float array (f32 or bf16)
    alpha: (1, C, 1) float array
    """
    B, C, T = x.shape
    assert alpha.shape == (1, C, 1)
    rows = B * C

    # Layout plumbing in the wrapper (cheap, contiguous reshape).
    x2 = x.reshape(rows, T)
    alpha_rows = jnp.broadcast_to(alpha, (B, C, 1)).reshape(rows, 1)

    # --- tile selection: lane-dense, VMEM-friendly on v5e/v6e/v7x ---
    if T <= 2048:
        t_tile = T                               # full dim: always legal
    else:
        t_tile = 2048                            # multiple of 128 -> unmasked vst
    r_target = max(8, target_elems_per_tile // t_tile)
    if rows <= r_target:
        r_tile = rows                            # full dim: always legal
    else:
        r_tile = max(8, (r_target // 8) * 8)     # multiple of 8 sublanes

    grid = (pl.cdiv(rows, r_tile), pl.cdiv(T, t_tile))

    out2 = pl.pallas_call(
        _snake_kernel,
        out_shape=jax.ShapeDtypeStruct((rows, T), x.dtype),
        grid_spec=pltpu.PrefetchScalarGridSpec(
            num_scalar_prefetch=0,
            grid=grid,
            in_specs=[
                pl.BlockSpec((r_tile, t_tile), lambda r, t: (r, t)),
                # Block index constant across the inner (time) axis -> the
                # tiny alpha tile is not re-fetched every time step.
                pl.BlockSpec((r_tile, 1), lambda r, t: (r, 0)),
            ],
            out_specs=pl.BlockSpec((r_tile, t_tile), lambda r, t: (r, t)),
        ),
        compiler_params=pltpu.CompilerParams(
            # Purely elementwise: every grid point is independent; lets the
            # grid shard across both TensorCores on v7x.
            dimension_semantics=("parallel", "parallel"),
            # ~2 MiB per buffer, double-buffered in+out ~ 8-9 MiB; raise v5e's
            # 16 MiB scoped default a bit while staying far under v7x's 64 MiB.
            vmem_limit_bytes=32 * 1024 * 1024,
        ),
    )(x2, alpha_rows)

    return out2.reshape(B, C, T)


if __name__ == "__main__":
    key = jax.random.PRNGKey(0)

    B, C, T = 2, 4, 16
    x = jax.random.normal(key, (B, C, T), dtype=jnp.float32)

    # Deterministic parameter init, matching nn.Parameter(torch.ones(1, C, 1)).
    alpha = jnp.ones((1, C, 1), dtype=jnp.float32)

    out = jax.block_until_ready(snake1d(x, alpha))

    # Reference check (plain JAX) — same math as the torchscript `snake`.
    # Tolerance accounts for the EUP approximate reciprocal + sin^2->cos
    # identity (low-order-bit differences only).
    ref = x + (1.0 / (alpha + 1e-9)) * jnp.sin(alpha * x) ** 2
    assert out.shape == x.shape
    assert jnp.allclose(out, ref, atol=2e-3, rtol=2e-3), float(
        jnp.max(jnp.abs(out - ref))
    )

    print("KERNEL_OK")
</pallas_src>

<mosaic_0001>
module attributes {stable_mosaic.version = 11 : i64} {
  func.func @_snake_kernel(%arg0: i32, %arg1: i32, %arg2: memref<8x16xf32, #tpu.memory_space<vmem>>, %arg3: memref<8x1xf32, #tpu.memory_space<vmem>>, %arg4: memref<8x16xf32, #tpu.memory_space<vmem>>) attributes {dimension_semantics = [#tpu.dimension_semantics<parallel>, #tpu.dimension_semantics<parallel>], iteration_bounds = array<i64: 1, 1>, scalar_prefetch = 0 : i64, scratch_operands = 0 : i64, tpu.core_type = #tpu.core_type<tc>, window_params = [{transform_indices = @transform_0, window_bounds = array<i64: 8, 16>}, {transform_indices = @transform_1, window_bounds = array<i64: 8, 1>}, {transform_indices = @transform_2, window_bounds = array<i64: 8, 16>}]} {
    %c0 = arith.constant 0 : index
    %c0_0 = arith.constant 0 : index
    %0 = vector.load %arg2[%c0, %c0_0] : memref<8x16xf32, #tpu.memory_space<vmem>>, vector<8x16xf32>
    %c0_1 = arith.constant 0 : index
    %c0_2 = arith.constant 0 : index
    %1 = vector.load %arg3[%c0_1, %c0_2] : memref<8x1xf32, #tpu.memory_space<vmem>>, vector<8x1xf32>
    %cst = arith.constant 9.99999971E-10 : f32
    %2 = vector.broadcast %cst : f32 to vector<8x1xf32>
    %3 = arith.addf %1, %2 : vector<8x1xf32>
    %4 = tpu.reciprocal %3 {approx = true} : vector<8x1xf32> -> vector<8x1xf32>
    %cst_3 = arith.constant 5.000000e-01 : f32
    %5 = vector.broadcast %cst_3 : f32 to vector<8x1xf32>
    %6 = arith.mulf %5, %4 : vector<8x1xf32>
    %cst_4 = arith.constant 2.000000e+00 : f32
    %7 = vector.broadcast %cst_4 : f32 to vector<8x1xf32>
    %8 = arith.mulf %7, %1 : vector<8x1xf32>
    %9 = vector.broadcast %8 : vector<8x1xf32> to vector<8x16xf32>
    %10 = arith.mulf %9, %0 : vector<8x16xf32>
    %11 = math.cos %10 : vector<8x16xf32>
    %cst_5 = arith.constant 1.000000e+00 : f32
    %12 = vector.broadcast %cst_5 : f32 to vector<8x16xf32>
    %13 = arith.subf %12, %11 : vector<8x16xf32>
    %14 = vector.broadcast %6 : vector<8x1xf32> to vector<8x16xf32>
    %15 = arith.mulf %14, %13 : vector<8x16xf32>
    %16 = arith.addf %0, %15 : vector<8x16xf32>
    %c0_6 = arith.constant 0 : index
    %c0_7 = arith.constant 0 : index
    %17 = vector.load %arg4[%c0_6, %c0_7] : memref<8x16xf32, #tpu.memory_space<vmem>>, vector<8x16xf32>
    tpu.vector_store %arg4[%c0_6, %c0_7], %16 {strides = array<i32>} : memref<8x16xf32, #tpu.memory_space<vmem>>, vector<8x16xf32>,
    return
  }
  func.func @transform_0(%arg0: i32, %arg1: i32) -> (i32, i32) {
    %c0_i32 = arith.constant 0 : i32
    return %arg0, %arg1 : i32, i32
  }
  func.func @transform_1(%arg0: i32, %arg1: i32) -> (i32, i32) {
    %c0_i32 = arith.constant 0 : i32
    %c0_i32_0 = arith.constant 0 : i32
    return %arg0, %c0_i32 : i32, i32
  }
  func.func @transform_2(%arg0: i32, %arg1: i32) -> (i32, i32) {
    %c0_i32 = arith.constant 0 : i32
    return %arg0, %arg1 : i32, i32
  }
}

</mosaic_0001>

<llo_original>
// kernel: tpu_custom_call.1
$region0: #{tpu_custom_call.1}
  #allocation0 [shape = 'u32[]', space=smem, size = 0x4, offset = 0x4, fixed_abs, tag = 'smem constant byte address 0x4 - core index']
  #allocation1 [shape = 'u32[144,128]{1,0:T(1,128)}', space=vmem, size = 0x12000, scoped, tag = 'internal scratch']
  %s0 = inlined_call_operand.vmem [shape: f32[8,16], index: 0, kind: input, shape index: {}]
  %s1 = inlined_call_operand.vmem [shape: f32[8,1], index: 1, kind: input, shape index: {}]
  %s2 = inlined_call_operand.hbm [shape: f32[8,16], index: 2, kind: output, shape index: {}]
  %s3 = sld [smem:[#allocation0]]
  $region18: #{tpu_custom_call.1} parent=0
    _
  %s5 = ssub.s32 1, %s3
  %s6 = scalar_select 0, %s5, %s3
  $region1: #{tpu_custom_call.1} parent=0
    #allocation2 [shape = 'u8[4096]{0}', space=vmem, size = 0x1000, scoped, tag = 'output window, operand 0, single buffered']
    #allocation3 [shape = 's32[1]{0}', space=sflag, size = 0x4, scoped, tag = 'scoped memory for tpu_custom_call.1']
    %7 = vsyncpa [#allocation3], 0
    // Predicated region
    $region2: #{tpu_custom_call.1} parent=1 // pred_check
      _
    $region3: #{tpu_custom_call.1} parent=1 // pred_check_branch
      %9 = sbr.rel (0) target = $region5
    $region4: #{tpu_custom_call.1} parent=1 // pred_region
      _
    $region5: #{tpu_custom_call.1} parent=1 // pred_fallthru
      _
    // Predicated region
    $region6: #{tpu_custom_call.1} parent=1 // pred_check
      _
    $region7: #{tpu_custom_call.1} parent=1 // pred_check_branch
      %11 = sbr.rel (0) target = $region9
    $region8: #{tpu_custom_call.1} parent=1 // pred_region
      _
    $region9: #{tpu_custom_call.1} parent=1 // pred_fallthru
      _
    %v12 = vld [vmem:[%s0] sm:$0xff]
    %v13 = vld [vmem:[%s1] sm:$0xff]
    %v14 = vadd.f32 %v13, 1e-09
    %v15 = vrcp.pop %v14
    %v16 = vmul.f32 %v15, 0.5
    %v17 = vmul.f32 %v13, 2.0
    %19 = vset.pattern.permute.xlu0 0
    %20 = vperm.xlu0 %19, %v17
    %v21 = vpop.permute.xlu0 %20
    %v23 = vmul.f32 %v21, %v12
    %v24 = vand.u32 2147483647, %v23
    %vm25 = vcmp.le.f32.partialorder %v24, 0.7853982
    %vm26 = vcmp.lt.s32.totalorder %v23, 0
    %v27 = vand.u32 %v23, 2139095040
    %v28 = vshrl.u32 %v27, 23
    %v29 = vsub.s32 %v28, 127
    %v30 = vand.u32 2147483647, %v23
    %v31 = vand.u32 %v30, 8388607
    %v32 = vor.u32 %v31, 8388608
    %v33 = vsub.s32 0, %v32
    %v34 = vadd.s32 %v29, 1
    %vm35 = vcmp.gt.s32.totalorder %v34, 0
    %v36 = vsel %vm35, %v34, 0
    %v37 = vshrl.u32 %v36, 5
    %v38 = vand.u32 %v36, 31
    %v39 = vsub.s32 32, %v38
    %v40 = vshrl.u32 683565275, %v39
    %v41 = vshll.u32 683565275, %v38
    %v42 = vshrl.u32 2475754826, %v39
    %v43 = vor.u32 %v41, %v42
    %v44 = vshll.u32 2475754826, %v38
    %v45 = vshrl.u32 2131351028, %v39
    %v46 = vor.u32 %v44, %v45
    %v47 = vshll.u32 2131351028, %v38
    %v48 = vshrl.u32 2102212464, %v39
    %v49 = vor.u32 %v47, %v48
    %v50 = vshll.u32 2102212464, %v38
    %v51 = vshrl.u32 920167782, %v39
    %v52 = vor.u32 %v50, %v51
    %v53 = vshll.u32 920167782, %v38
    %v54 = vshrl.u32 1326507024, %v39
    %v55 = vor.u32 %v53, %v54
    %vm56 = vcmp.lt.s32.totalorder %v37, 1
    %vm57 = vcmp.lt.s32.totalorder %v37, 2
    %vm58 = vcmp.lt.s32.totalorder %v37, 3
    %vm59 = vcmp.lt.s32.totalorder %v37, 4
    %v60 = vsel %vm56, %v40, %v43
    %v61 = vsel %vm59, %v49, 2102212464
    %v62 = vsel %vm58, %v46, %v61
    %v63 = vsel %vm57, %v60, %v62
    %v64 = vsel %vm56, %v43, %v46
    %v65 = vsel %vm59, %v52, 920167782
    %v66 = vsel %vm58, %v49, %v65
    %v67 = vsel %vm57, %v64, %v66
    %v68 = vsel %vm56, %v46, %v49
    %v69 = vsel %vm59, %v55, 1326507024
    %v70 = vsel %vm58, %v52, %v69
    %v71 = vsel %vm57, %v68, %v70
    %v72 = vshll.u32 %v32, 8
    %v73 = vmul.u32.u64.compose %v72, %v71
    %v74 = vextract.low.u32 %v73
    %v75 = vextract.high.u32 %v73
    %v76 = vmul.u32.u64.compose %v72, %v67
    %v77 = vextract.low.u32 %v76
    %v78 = vextract.high.u32 %v76
    %v79 = vmul.u32 %v72, %v63
    %v80 = vadd.s32 %v75, %v77
    %vm81 = vc.u32 %v75, %v77
    %v82 = vadd.s32 %v78, 1
    %v83 = vsel %vm81, %v82, %v78
    %v84 = vadd.s32 %v79, %v83
    %v85 = vadd.s32 %v84, 536870912
    %v86 = vshrl.u32 %v85, 30
    %v87 = vshll.u32 %v86, 30
    %v88 = vsub.s32 %v84, %v87
    %vm89 = vcmp.lt.s32.totalorder %v88, 0
    %v90 = vsub.s32 0, %v88
    %v91 = vsel %vm89, %v90, %v88
    %v92 = vclz %v91
    %v93 = vsub.s32 %v92, 2
    %vm94 = vcmp.gt.s32.totalorder 0, %v93
    %v95 = vsel %vm94, 0, %v93
    %v96 = vsub.s32 32, %v95
    %v97 = vshll.u32 %v88, %v95
    %v98 = vshrl.u32 %v80, %v96
    %v99 = vor.u32 %v97, %v98
    %v100 = vsub.s32 4294967266, %v95
    %v101 = vadd.s32 %v100, 127
    %v102 = vshll.u32 %v101, 23
    %v103 = vor.u32 4788187, %v102
    %v104 = vand.u32 2147483647, %v103
    %v106 = vcvt.s32.f32 %v99
    %v107 = vmul.f32 %v106, %v104
    %v108 = vxor.u32 %v107, 2147483648
    %v109 = vsel %vm26, %v108, %v107
    %v110 = vsub.s32 4, %v86
    %v111 = vsel %vm26, %v110, %v86
    %v112 = vsel %vm25, %v23, %v109
    %v113 = vsel %vm25, 0, %v111
    %v114 = vcosq.f32.pop %v112
    %v115 = vsinq.f32.pop %v112
    %vm116 = vweird.f32 %v23
    %v117 = vand.u32 %v113, 3
    %vm118 = vcmp.lt.s32.totalorder %v117, 2
    %vm119 = vcmp.eq.s32.totalorder %v117, 0
    %v120 = vxor.u32 %v115, 2147483648
    %v121 = vsel %vm119, %v114, %v120
    %vm122 = vcmp.eq.s32.totalorder %v117, 2
    %v123 = vxor.u32 %v114, 2147483648
    %v124 = vsel %vm122, %v123, %v115
    %v125 = vsel %vm118, %v121, %v124
    %v126 = vsel %vm116, nan, %v125
    %v127 = vsub.f32 1.0, %v126
    %129 = vset.pattern.permute.xlu0 0
    %130 = vperm.xlu0 %129, %v16
    %v131 = vpop.permute.xlu0 %130
    %v133 = vmul.f32 %v131, %v127
    %v134 = vadd.f32 %v12, %v133
    %vm135 = vcmask 130048
    %136 = vst.msk [vmem:[#allocation2] sm:$0xff] %vm135, %v134
    // Predicated region
    $region10: #{tpu_custom_call.1} parent=1 // pred_check
      _
    $region11: #{tpu_custom_call.1} parent=1 // pred_check_branch
      %138 = sbr.rel (0) target = $region13
    $region12: #{tpu_custom_call.1} parent=1 // pred_region
      %s140 = ssub.s32 128, 128
      %141 = vsyncadd [#allocation3], %s140
      %s143 = sshll.u32 [#allocation2], 4
      %s144 = int_to_ptr.vmem [resolvable:$true] %s143
      %146 = dma.vmem_to_hbm [thread:$0]  %s144, 128, %s2, [#allocation3]
    $region13: #{tpu_custom_call.1} parent=1 // pred_fallthru
      _
    // Predicated region
    $region14: #{tpu_custom_call.1} parent=1 // pred_check
      _
    $region15: #{tpu_custom_call.1} parent=1 // pred_check_branch
      %148 = sbr.rel (0) target = $region17
    $region16: #{tpu_custom_call.1} parent=1 // pred_region
      %149 = dma.done [#allocation3], 128
    $region17: #{tpu_custom_call.1} parent=1 // pred_fallthru
      _
    %150 = vsyncpa [#allocation3], 1

</llo_original>
